<compile_context>
chip_gen: v7x
topology: tpu7x:2x2x1
jax: 0.10.0
libtpu: 0.0.40
codegen_flags: <defaults>
</compile_context>

<pallas_src>
import jax
import jax.numpy as jnp
import numpy as np
from jax.experimental import pallas as pl
from jax.experimental.pallas import tpu as pltpu

LANE = 128  # vreg lane width -- feature / hidden / class dims padded to this


# ----------------------------- small helpers --------------------------------

def _pad2(a, rows, cols):
    """Zero-pad a 2-D array up to (rows, cols)."""
    return jnp.pad(a, ((0, rows - a.shape[0]), (0, cols - a.shape[1])))


def _round_up(n, m):
    return ((n + m - 1) // m) * m


# ----------------------------- fused Pallas kernel --------------------------

def make_fused_kernel(rels1, groups1, dst_order, x_order, rels2, labeled,
                      b_pad, eff_batch, num_classes):
    """Fused forward for a fixed (static) schema.

    Ref order:
      [adj per rel1] [x per used type]
      [W1_stack, b1_sum per dst type]        (W1_stack = [W_rel_r ...; sum_r W_root_r])
      [adj2 per rel2 (batch rows only)] [W2_stack, b2_sum]
      [labels lane-broadcast int32]  ->  [loss (SMEM (1,1))]
    """
    n1, nx, nt, n2 = len(rels1), len(x_order), len(dst_order), len(rels2)

    def kernel(*refs):
        i = 0
        adj1 = {r: refs[i + k] for k, r in enumerate(rels1)};      i += n1
        xin = {t: refs[i + k] for k, t in enumerate(x_order)};     i += nx
        w1 = {t: refs[i + 2 * k] for k, t in enumerate(dst_order)}
        b1 = {t: refs[i + 2 * k + 1] for k, t in enumerate(dst_order)}; i += 2 * nt
        adj2 = {r: refs[i + k] for k, r in enumerate(rels2)};      i += n2
        w2_ref, b2_ref = refs[i], refs[i + 1];                     i += 2
        lbl_ref = refs[i];                                         i += 1
        loss_ref = refs[i]

        f32, bf16 = jnp.float32, jnp.bfloat16

        # ---- layer 1: neighborhood sum-aggregation per relation (bf16 MXU, f32 acc)
        agg = {r: jnp.dot(adj1[r][...], xin[r[0]][...], preferred_element_type=f32)
               for r in rels1}

        # ---- layer 1: per-dst fused weight apply -- one deep-K MXU pass:
        #      concat([agg_r ..., x_dst]) @ [W_rel_r ...; sum_r W_root_r] + sum_r b_r
        #      (HeteroConv 'sum' + msg/root add folded into MXU accumulation), then ReLU.
        h1 = {}
        for t in dst_order:
            pieces = [agg[r] for r in groups1[t]] + [xin[t][...].astype(f32)]
            cat = jnp.concatenate(pieces, axis=-1).astype(bf16)
            y1 = jnp.dot(cat, w1[t][...], preferred_element_type=f32) + b1[t][...]
            h1[t] = jnp.maximum(y1, 0.0)                     # fused ReLU (VPU)

        # ---- layer 2 (only the batch rows feeding the loss): same fused pattern
        pieces2 = [jnp.dot(adj2[r][...], h1[r[0]].astype(bf16),
                           preferred_element_type=f32) for r in rels2]
        pieces2.append(h1[labeled][:b_pad])
        cat2 = jnp.concatenate(pieces2, axis=-1).astype(bf16)
        logits = jnp.dot(cat2, w2_ref[...], preferred_element_type=f32) + b2_ref[...]

        # ---- cross-entropy (mean over the eff_batch valid rows)
        col = jax.lax.broadcasted_iota(jnp.int32, logits.shape, 1)
        valid_c = col < num_classes                          # mask lane-padded classes
        z = jnp.where(valid_c, logits, jnp.float32(-1e30))
        m = jnp.max(z, axis=-1, keepdims=True)
        p = jnp.where(valid_c, jnp.exp(z - m), 0.0)
        lse = m + jnp.log(jnp.sum(p, axis=-1, keepdims=True))
        onehot = (col == lbl_ref[...]).astype(f32)           # in-kernel one-hot
        tgt = jnp.sum(onehot * logits, axis=-1, keepdims=True)
        row = jax.lax.broadcasted_iota(jnp.int32, (b_pad, 1), 0)
        row_mask = (row < eff_batch).astype(f32)             # mask sublane-padded rows
        loss_ref[0, 0] = jnp.sum((lse - tgt) * row_mask) * (1.0 / eff_batch)

    return kernel


# ----------------------------- host wrapper ---------------------------------

def fused_forward(params, x_dict, adj_dict, y, labeled_node_type, num_classes, batch):
    bf = jnp.bfloat16
    all_rels = list(adj_dict.keys())

    rels2 = tuple(r for r in all_rels if r[2] == labeled_node_type)
    assert rels2, "no relation feeds the labeled node type"
    needed = {r[0] for r in rels2} | {labeled_node_type}
    # layer-1 dead-code elimination: only dst types consumed by layer 2 / the loss
    rels1 = tuple(r for r in all_rels if r[2] in needed)
    dst_order = tuple(sorted(needed))
    groups1 = {t: tuple(r for r in rels1 if r[2] == t) for t in dst_order}
    for t in dst_order:
        assert groups1[t], f"node type {t} has no incoming relation"
    x_order = tuple(sorted({r[0] for r in rels1} | needed))

    n_lab = x_dict[labeled_node_type].shape[0]
    eff_batch = min(batch, n_lab)
    b_pad = _round_up(eff_batch, 8)
    assert b_pad <= n_lab, "batch padding exceeds labeled node count"

    vmem = pl.BlockSpec(memory_space=pltpu.MemorySpace.VMEM)
    args, in_specs = [], []

    # adjacency for layer 1 (full rows) -- exact in bf16 for small multi-edge counts
    for r in rels1:
        args.append(adj_dict[r].astype(bf)); in_specs.append(vmem)
    # node features, lane-padded, bf16
    for t in x_order:
        x = x_dict[t]
        args.append(_pad2(x, x.shape[0], LANE).astype(bf)); in_specs.append(vmem)
    # layer-1 per-dst stacked weights [W_rel_r ...; sum_r W_root_r] and summed bias
    for t in dst_order:
        blocks = [_pad2(params["conv1"][r]["w_rel"], LANE, LANE) for r in groups1[t]]
        w_root_sum = sum(_pad2(params["conv1"][r]["w_root"], LANE, LANE)
                         for r in groups1[t])
        args.append(jnp.concatenate(blocks + [w_root_sum], axis=0).astype(bf))
        in_specs.append(vmem)
        args.append(sum(_pad2(params["conv1"][r]["b_rel"], 1, LANE) for r in groups1[t]))
        in_specs.append(vmem)
    # layer-2 adjacency, host-sliced to the batch rows that feed the loss
    for r in rels2:
        a = adj_dict[r][:eff_batch]
        a = jnp.pad(a, ((0, b_pad - a.shape[0]), (0, 0)))
        args.append(a.astype(bf)); in_specs.append(vmem)
    # layer-2 stacked weights / summed bias (only relations into the labeled type)
    blocks2 = [_pad2(params["conv2"][r]["w_rel"], LANE, LANE) for r in rels2]
    w2_root_sum = sum(_pad2(params["conv2"][r]["w_root"], LANE, LANE) for r in rels2)
    args.append(jnp.concatenate(blocks2 + [w2_root_sum], axis=0).astype(bf))
    in_specs.append(vmem)
    args.append(sum(_pad2(params["conv2"][r]["b_rel"], 1, LANE) for r in rels2))
    in_specs.append(vmem)
    # labels, lane-broadcast int32 (no 1-lane VMEM tile / broadcast compare)
    lbl = jnp.broadcast_to(y[:eff_batch].astype(jnp.int32)[:, None], (eff_batch, LANE))
    args.append(jnp.pad(lbl, ((0, b_pad - eff_batch), (0, 0)))); in_specs.append(vmem)

    # advisory cost estimate for XLA's scheduler
    flops = 0
    for r in rels1:
        nd, ns = adj_dict[r].shape
        flops += 2 * nd * ns * LANE
    for t in dst_order:
        flops += 2 * x_dict[t].shape[0] * (len(groups1[t]) + 1) * LANE * LANE
    for r in rels2:
        flops += 2 * b_pad * adj_dict[r].shape[1] * LANE
    flops += 2 * b_pad * (len(rels2) + 1) * LANE * LANE
    bytes_accessed = sum(int(np.prod(a.shape)) * a.dtype.itemsize for a in args) + 4

    kernel = make_fused_kernel(rels1, groups1, dst_order, x_order, rels2,
                               labeled_node_type, b_pad, eff_batch, num_classes)
    loss = pl.pallas_call(
        kernel,
        out_shape=jax.ShapeDtypeStruct((1, 1), jnp.float32),
        in_specs=in_specs,
        out_specs=pl.BlockSpec(memory_space=pltpu.MemorySpace.SMEM),
        compiler_params=pltpu.CompilerParams(vmem_limit_bytes=32 * 1024 * 1024),
        cost_estimate=pl.CostEstimate(flops=flops,
                                      transcendentals=b_pad * (LANE + 1),
                                      bytes_accessed=bytes_accessed),
    )(*args)
    return [loss[0, 0]]


# ----------------------------- parameter init -------------------------------

def init_graphconv_params(key, in_src, in_dst, out):
    k1, k2, k3 = jax.random.split(key, 3)
    return dict(
        w_rel=0.1 * jax.random.normal(k1, (in_src, out), jnp.float32),   # lin_rel.weight^T
        b_rel=0.01 * jax.random.normal(k2, (1, out), jnp.float32),       # lin_rel.bias
        w_root=0.1 * jax.random.normal(k3, (in_dst, out), jnp.float32),  # lin_root.weight^T
    )


# ----------------------------- pure-JAX reference ---------------------------

def _ref_forward(params, x_dict, adj_dict, y, labeled_node_type, batch_size):
    hi = jax.lax.Precision.HIGHEST

    def gc(adj, xs, p, xd):
        agg = jnp.dot(adj, xs, precision=hi)
        return (jnp.dot(agg, p["w_rel"], precision=hi) + p["b_rel"]
                + jnp.dot(xd, p["w_root"], precision=hi))

    def layer(xd, lp):
        out = {}
        for rel, adj in adj_dict.items():
            src, _, dst = rel
            v = gc(adj, xd[src], lp[rel], xd[dst])
            out[dst] = v if dst not in out else out[dst] + v
        return out

    h = layer(x_dict, params["conv1"])
    h = {k: jnp.maximum(v, 0.0) for k, v in h.items()}
    h = layer(h, params["conv2"])
    logits = h[labeled_node_type][:batch_size]
    logp = jax.nn.log_softmax(logits, axis=-1)
    return -jnp.mean(logp[jnp.arange(batch_size), y[:batch_size]])


# --------------------------------- main -------------------------------------

if __name__ == "__main__":
    key = jax.random.PRNGKey(0)

    # small synthetic hetero graph (stand-in for FakeHeteroDataset)
    N = {"v0": 32, "v1": 16}          # nodes per type
    F_in = {"v0": 16, "v1": 8}        # input feature dims per type
    H = 32                            # h_size
    NUM_CLASSES = 4
    BATCH = 8                         # stand-in for batch_size=100
    LABELED = "v0"
    EDGE_TYPES = [("v0", "e0", "v0"), ("v0", "e1", "v1"), ("v1", "e2", "v0")]
    NUM_EDGES = 64

    keys = jax.random.split(key, 16)

    # node features
    x_dict = {
        "v0": jax.random.normal(keys[0], (N["v0"], F_in["v0"]), jnp.float32),
        "v1": jax.random.normal(keys[1], (N["v1"], F_in["v1"]), jnp.float32),
    }

    # labels for the labeled node type
    y = jax.random.randint(keys[2], (N[LABELED],), 0, NUM_CLASSES, dtype=jnp.int32)

    # random edge_index per relation -> dense adjacency [n_dst, n_src]
    adj_dict = {}
    for i, (src, rel, dst) in enumerate(EDGE_TYPES):
        ks, kd = jax.random.split(keys[3 + i])
        src_idx = jax.random.randint(ks, (NUM_EDGES,), 0, N[src])
        dst_idx = jax.random.randint(kd, (NUM_EDGES,), 0, N[dst])
        adj = jnp.zeros((N[dst], N[src]), jnp.float32).at[dst_idx, src_idx].add(1.0)
        adj_dict[(src, rel, dst)] = adj

    # parameters: conv1 maps (F_src, F_dst) -> H ; conv2 maps H -> NUM_CLASSES
    params = {"conv1": {}, "conv2": {}}
    for i, (src, rel, dst) in enumerate(EDGE_TYPES):
        params["conv1"][(src, rel, dst)] = init_graphconv_params(
            keys[8 + i], F_in[src], F_in[dst], H)
        params["conv2"][(src, rel, dst)] = init_graphconv_params(
            keys[12 + i], H, H, NUM_CLASSES)

    out = fused_forward(params, x_dict, adj_dict, y, LABELED, NUM_CLASSES, BATCH)
    loss = jax.block_until_ready(out[0])

    loss_ref = jax.block_until_ready(
        _ref_forward(params, x_dict, adj_dict, y, LABELED, BATCH))

    assert np.isfinite(float(loss)), "kernel produced non-finite loss"
    assert np.allclose(float(loss), float(loss_ref), rtol=2e-2, atol=5e-2), (
        f"mismatch: kernel={float(loss)} ref={float(loss_ref)}")

    print("KERNEL_OK")
</pallas_src>

<mosaic_0001>
module attributes {stable_mosaic.version = 11 : i64} {
  func.func @kernel(%arg0: memref<32x32xbf16, #tpu.memory_space<vmem>>, %arg1: memref<16x32xbf16, #tpu.memory_space<vmem>>, %arg2: memref<32x16xbf16, #tpu.memory_space<vmem>>, %arg3: memref<32x128xbf16, #tpu.memory_space<vmem>>, %arg4: memref<16x128xbf16, #tpu.memory_space<vmem>>, %arg5: memref<384x128xbf16, #tpu.memory_space<vmem>>, %arg6: memref<1x128xf32, #tpu.memory_space<vmem>>, %arg7: memref<256x128xbf16, #tpu.memory_space<vmem>>, %arg8: memref<1x128xf32, #tpu.memory_space<vmem>>, %arg9: memref<8x32xbf16, #tpu.memory_space<vmem>>, %arg10: memref<8x16xbf16, #tpu.memory_space<vmem>>, %arg11: memref<384x128xbf16, #tpu.memory_space<vmem>>, %arg12: memref<1x128xf32, #tpu.memory_space<vmem>>, %arg13: memref<8x128xi32, #tpu.memory_space<vmem>>, %arg14: memref<1x1xf32, #tpu.memory_space<smem>>) attributes {dimension_semantics = [], scalar_prefetch = 0 : i64, scratch_operands = 0 : i64, tpu.core_type = #tpu.core_type<tc>} {
    %c0 = arith.constant 0 : index
    %c0_0 = arith.constant 0 : index
    %0 = vector.load %arg0[%c0, %c0_0] : memref<32x32xbf16, #tpu.memory_space<vmem>>, vector<32x32xbf16>
    %c0_1 = arith.constant 0 : index
    %c0_2 = arith.constant 0 : index
    %1 = vector.load %arg3[%c0_1, %c0_2] : memref<32x128xbf16, #tpu.memory_space<vmem>>, vector<32x128xbf16>
    %cst = arith.constant dense<0.000000e+00> : vector<32x128xf32>
    %2 = tpu.matmul %0, %1, %cst {dimension_numbers = #tpu.dot_dimension_numbers<[1], [0], [0], [1], [0, 0, 1, 1], [], []>} : vector<32x32xbf16>, vector<32x128xbf16>, vector<32x128xf32> -> vector<32x128xf32>
    %c0_3 = arith.constant 0 : index
    %c0_4 = arith.constant 0 : index
    %3 = vector.load %arg1[%c0_3, %c0_4] : memref<16x32xbf16, #tpu.memory_space<vmem>>, vector<16x32xbf16>
    %c0_5 = arith.constant 0 : index
    %c0_6 = arith.constant 0 : index
    %4 = vector.load %arg3[%c0_5, %c0_6] : memref<32x128xbf16, #tpu.memory_space<vmem>>, vector<32x128xbf16>
    %cst_7 = arith.constant dense<0.000000e+00> : vector<16x128xf32>
    %5 = tpu.matmul %3, %4, %cst_7 {dimension_numbers = #tpu.dot_dimension_numbers<[1], [0], [0], [1], [0, 0, 1, 1], [], []>} : vector<16x32xbf16>, vector<32x128xbf16>, vector<16x128xf32> -> vector<16x128xf32>
    %c0_8 = arith.constant 0 : index
    %c0_9 = arith.constant 0 : index
    %6 = vector.load %arg2[%c0_8, %c0_9] : memref<32x16xbf16, #tpu.memory_space<vmem>>, vector<32x16xbf16>
    %c0_10 = arith.constant 0 : index
    %c0_11 = arith.constant 0 : index
    %7 = vector.load %arg4[%c0_10, %c0_11] : memref<16x128xbf16, #tpu.memory_space<vmem>>, vector<16x128xbf16>
    %cst_12 = arith.constant dense<0.000000e+00> : vector<32x128xf32>
    %8 = tpu.matmul %6, %7, %cst_12 {dimension_numbers = #tpu.dot_dimension_numbers<[1], [0], [0], [1], [0, 0, 1, 1], [], []>} : vector<32x16xbf16>, vector<16x128xbf16>, vector<32x128xf32> -> vector<32x128xf32>
    %c0_13 = arith.constant 0 : index
    %c0_14 = arith.constant 0 : index
    %9 = vector.load %arg3[%c0_13, %c0_14] : memref<32x128xbf16, #tpu.memory_space<vmem>>, vector<32x128xbf16>
    %10 = arith.extf %9 : vector<32x128xbf16> to vector<32x128xf32>
    %11 = tpu.concatenate %2, %8, %10 in 1 : vector<32x128xf32>, vector<32x128xf32>, vector<32x128xf32> -> vector<32x384xf32>
    %12 = arith.truncf %11 : vector<32x384xf32> to vector<32x384xbf16>
    %c0_15 = arith.constant 0 : index
    %c0_16 = arith.constant 0 : index
    %13 = vector.load %arg5[%c0_15, %c0_16] : memref<384x128xbf16, #tpu.memory_space<vmem>>, vector<384x128xbf16>
    %cst_17 = arith.constant dense<0.000000e+00> : vector<32x128xf32>
    %14 = tpu.matmul %12, %13, %cst_17 {dimension_numbers = #tpu.dot_dimension_numbers<[1], [0], [0], [1], [0, 0, 1, 1], [], []>} : vector<32x384xbf16>, vector<384x128xbf16>, vector<32x128xf32> -> vector<32x128xf32>
    %c0_18 = arith.constant 0 : index
    %c0_19 = arith.constant 0 : index
    %15 = vector.load %arg6[%c0_18, %c0_19] : memref<1x128xf32, #tpu.memory_space<vmem>>, vector<1x128xf32>
    %16 = vector.broadcast %15 : vector<1x128xf32> to vector<32x128xf32>
    %17 = arith.addf %14, %16 : vector<32x128xf32>
    %cst_20 = arith.constant 0.000000e+00 : f32
    %18 = vector.broadcast %cst_20 : f32 to vector<32x128xf32>
    %19 = arith.maximumf %17, %18 : vector<32x128xf32>
    %c0_21 = arith.constant 0 : index
    %c0_22 = arith.constant 0 : index
    %20 = vector.load %arg4[%c0_21, %c0_22] : memref<16x128xbf16, #tpu.memory_space<vmem>>, vector<16x128xbf16>
    %21 = arith.extf %20 : vector<16x128xbf16> to vector<16x128xf32>
    %22 = tpu.concatenate %5, %21 in 1 : vector<16x128xf32>, vector<16x128xf32> -> vector<16x256xf32>
    %23 = arith.truncf %22 : vector<16x256xf32> to vector<16x256xbf16>
    %c0_23 = arith.constant 0 : index
    %c0_24 = arith.constant 0 : index
    %24 = vector.load %arg7[%c0_23, %c0_24] : memref<256x128xbf16, #tpu.memory_space<vmem>>, vector<256x128xbf16>
    %cst_25 = arith.constant dense<0.000000e+00> : vector<16x128xf32>
    %25 = tpu.matmul %23, %24, %cst_25 {dimension_numbers = #tpu.dot_dimension_numbers<[1], [0], [0], [1], [0, 0, 1, 1], [], []>} : vector<16x256xbf16>, vector<256x128xbf16>, vector<16x128xf32> -> vector<16x128xf32>
    %c0_26 = arith.constant 0 : index
    %c0_27 = arith.constant 0 : index
    %26 = vector.load %arg8[%c0_26, %c0_27] : memref<1x128xf32, #tpu.memory_space<vmem>>, vector<1x128xf32>
    %27 = vector.broadcast %26 : vector<1x128xf32> to vector<16x128xf32>
    %28 = arith.addf %25, %27 : vector<16x128xf32>
    %cst_28 = arith.constant 0.000000e+00 : f32
    %29 = vector.broadcast %cst_28 : f32 to vector<16x128xf32>
    %30 = arith.maximumf %28, %29 : vector<16x128xf32>
    %c0_29 = arith.constant 0 : index
    %c0_30 = arith.constant 0 : index
    %31 = vector.load %arg9[%c0_29, %c0_30] : memref<8x32xbf16, #tpu.memory_space<vmem>>, vector<8x32xbf16>
    %32 = arith.truncf %19 : vector<32x128xf32> to vector<32x128xbf16>
    %cst_31 = arith.constant dense<0.000000e+00> : vector<8x128xf32>
    %33 = tpu.matmul %31, %32, %cst_31 {dimension_numbers = #tpu.dot_dimension_numbers<[1], [0], [0], [1], [0, 0, 1, 1], [], []>} : vector<8x32xbf16>, vector<32x128xbf16>, vector<8x128xf32> -> vector<8x128xf32>
    %c0_32 = arith.constant 0 : index
    %c0_33 = arith.constant 0 : index
    %34 = vector.load %arg10[%c0_32, %c0_33] : memref<8x16xbf16, #tpu.memory_space<vmem>>, vector<8x16xbf16>
    %35 = arith.truncf %30 : vector<16x128xf32> to vector<16x128xbf16>
    %cst_34 = arith.constant dense<0.000000e+00> : vector<8x128xf32>
    %36 = tpu.matmul %34, %35, %cst_34 {dimension_numbers = #tpu.dot_dimension_numbers<[1], [0], [0], [1], [0, 0, 1, 1], [], []>} : vector<8x16xbf16>, vector<16x128xbf16>, vector<8x128xf32> -> vector<8x128xf32>
    %37 = vector.extract_strided_slice %19 {offsets = [0, 0], sizes = [8, 128], strides = [1, 1]} : vector<32x128xf32> to vector<8x128xf32>
    %38 = tpu.concatenate %33, %36, %37 in 1 : vector<8x128xf32>, vector<8x128xf32>, vector<8x128xf32> -> vector<8x384xf32>
    %39 = arith.truncf %38 : vector<8x384xf32> to vector<8x384xbf16>
    %c0_35 = arith.constant 0 : index
    %c0_36 = arith.constant 0 : index
    %40 = vector.load %arg11[%c0_35, %c0_36] : memref<384x128xbf16, #tpu.memory_space<vmem>>, vector<384x128xbf16>
    %cst_37 = arith.constant dense<0.000000e+00> : vector<8x128xf32>
    %41 = tpu.matmul %39, %40, %cst_37 {dimension_numbers = #tpu.dot_dimension_numbers<[1], [0], [0], [1], [0, 0, 1, 1], [], []>} : vector<8x384xbf16>, vector<384x128xbf16>, vector<8x128xf32> -> vector<8x128xf32>
    %c0_38 = arith.constant 0 : index
    %c0_39 = arith.constant 0 : index
    %42 = vector.load %arg12[%c0_38, %c0_39] : memref<1x128xf32, #tpu.memory_space<vmem>>, vector<1x128xf32>
    %43 = vector.broadcast %42 : vector<1x128xf32> to vector<8x128xf32>
    %44 = arith.addf %41, %43 : vector<8x128xf32>
    %45 = tpu.iota {dimensions = array<i32: 1>} : vector<8x128xi32>
    %c4_i32 = arith.constant 4 : i32
    %46 = vector.broadcast %c4_i32 : i32 to vector<8x128xi32>
    %47 = arith.cmpi slt, %45, %46 : vector<8x128xi32>
    %cst_40 = arith.constant -1.000000e+30 : f32
    %48 = vector.broadcast %cst_40 : f32 to vector<8x128xf32>
    %49 = arith.select %47, %44, %48 : vector<8x128xi1>, vector<8x128xf32>
    %cst_41 = arith.constant dense<0xFF800000> : vector<8xf32>
    %50 = vector.multi_reduction <maximumf>, %49, %cst_41 [1] : vector<8x128xf32> to vector<8xf32>
    %51 = vector.shape_cast %50 : vector<8xf32> to vector<8x1xf32>
    %52 = vector.broadcast %51 : vector<8x1xf32> to vector<8x128xf32>
    %53 = arith.subf %49, %52 : vector<8x128xf32>
    %54 = math.exp %53 : vector<8x128xf32>
    %cst_42 = arith.constant 0.000000e+00 : f32
    %55 = vector.broadcast %cst_42 : f32 to vector<8x128xf32>
    %56 = arith.select %47, %54, %55 : vector<8x128xi1>, vector<8x128xf32>
    %cst_43 = arith.constant dense<0.000000e+00> : vector<8xf32>
    %57 = vector.multi_reduction <add>, %56, %cst_43 [1] : vector<8x128xf32> to vector<8xf32>
    %58 = vector.shape_cast %57 : vector<8xf32> to vector<8x1xf32>
    %59 = math.log %58 : vector<8x1xf32>
    %60 = arith.addf %51, %59 : vector<8x1xf32>
    %c0_44 = arith.constant 0 : index
    %c0_45 = arith.constant 0 : index
    %61 = vector.load %arg13[%c0_44, %c0_45] : memref<8x128xi32, #tpu.memory_space<vmem>>, vector<8x128xi32>
    %62 = arith.cmpi eq, %45, %61 : vector<8x128xi32>
    %63 = arith.extui %62 : vector<8x128xi1> to vector<8x128xi32>
    %64 = arith.sitofp %63 : vector<8x128xi32> to vector<8x128xf32>
    %65 = arith.mulf %64, %44 : vector<8x128xf32>
    %cst_46 = arith.constant dense<0.000000e+00> : vector<8xf32>
    %66 = vector.multi_reduction <add>, %65, %cst_46 [1] : vector<8x128xf32> to vector<8xf32>
    %67 = vector.shape_cast %66 : vector<8xf32> to vector<8x1xf32>
    %68 = tpu.iota {dimensions = array<i32: 0>} : vector<8x1xi32>
    %c8_i32 = arith.constant 8 : i32
    %69 = vector.broadcast %c8_i32 : i32 to vector<8x1xi32>
    %70 = arith.cmpi slt, %68, %69 : vector<8x1xi32>
    %71 = arith.extui %70 : vector<8x1xi1> to vector<8x1xi32>
    %72 = arith.sitofp %71 : vector<8x1xi32> to vector<8x1xf32>
    %73 = arith.subf %60, %67 : vector<8x1xf32>
    %74 = arith.mulf %73, %72 : vector<8x1xf32>
    %75 = vector.shape_cast %74 : vector<8x1xf32> to vector<1x8x1xf32>
    %cst_47 = arith.constant dense<0.000000e+00> : vector<1xf32>
    %76 = vector.multi_reduction <add>, %75, %cst_47 [1, 2] : vector<1x8x1xf32> to vector<1xf32>
    %77 = vector.shape_cast %76 : vector<1xf32> to vector<1x1x1xf32>
    %78 = vector.extract %77[0, 0, 0] : f32 from vector<1x1x1xf32>
    %cst_48 = arith.constant 1.250000e-01 : f32
    %79 = arith.mulf %78, %cst_48 : f32
    %c0_49 = arith.constant 0 : index
    %c0_50 = arith.constant 0 : index
    %80 = memref.load %arg14[%c0_49, %c0_50] : memref<1x1xf32, #tpu.memory_space<smem>>
    memref.store %79, %arg14[%c0_49, %c0_50] : memref<1x1xf32, #tpu.memory_space<smem>>
    return
  }
}

</mosaic_0001>

<llo_original>
// kernel: tpu_custom_call.1
$region0: #{tpu_custom_call.1}
  #allocation0 [shape = 'u32[]', space=smem, size = 0x4, offset = 0x4, fixed_abs, tag = 'smem constant byte address 0x4 - core index']
  #allocation1 [shape = 'u32[144,128]{1,0:T(1,128)}', space=vmem, size = 0x12000, scoped, tag = 'internal scratch']
  %s0 = inlined_call_operand.vmem [shape: bf16[32,32], index: 0, kind: input, shape index: {}]
  %s1 = inlined_call_operand.hbm [shape: bf16[16,32], index: 1, kind: input, shape index: {}]
  %s2 = inlined_call_operand.vmem [shape: bf16[32,16], index: 2, kind: input, shape index: {}]
  %s3 = inlined_call_operand.vmem [shape: bf16[32,128], index: 3, kind: input, shape index: {}]
  %s4 = inlined_call_operand.hbm [shape: bf16[16,128], index: 4, kind: input, shape index: {}]
  %s5 = inlined_call_operand.hbm [shape: bf16[384,128], index: 5, kind: input, shape index: {}]
  %s6 = inlined_call_operand.vmem [shape: f32[1,128], index: 6, kind: input, shape index: {}]
  %s7 = inlined_call_operand.hbm [shape: bf16[256,128], index: 7, kind: input, shape index: {}]
  %s8 = inlined_call_operand.vmem [shape: f32[1,128], index: 8, kind: input, shape index: {}]
  %s9 = inlined_call_operand.vmem [shape: bf16[8,32], index: 9, kind: input, shape index: {}]
  %s10 = inlined_call_operand.vmem [shape: bf16[8,16], index: 10, kind: input, shape index: {}]
  %s11 = inlined_call_operand.hbm [shape: bf16[384,128], index: 11, kind: input, shape index: {}]
  %s12 = inlined_call_operand.vmem [shape: f32[1,128], index: 12, kind: input, shape index: {}]
  %s13 = inlined_call_operand.vmem [shape: s32[8,128], index: 13, kind: input, shape index: {}]
  %s14 = inlined_call_operand.hbm [shape: f32[1,1], index: 14, kind: output, shape index: {}]
  %s15 = sld [smem:[#allocation0]]
  $region86: #{tpu_custom_call.1} parent=0
    _
  %s17 = ssub.s32 1, %s15
  %s18 = scalar_select 0, %s17, %s15
  $region1: #{tpu_custom_call.1} parent=0
    #allocation2 [shape = 'u8[4096]{0}', space=vmem, size = 0x1000, scoped, tag = 'input window, operand 1, single buffered']
    #allocation3 [shape = 's32[1]{0}', space=sflag, size = 0x4, scoped, tag = 'scoped memory for tpu_custom_call.1']
    #allocation4 [shape = 's32[1]{0}', space=sflag, size = 0x4, scoped, tag = 'scoped memory for tpu_custom_call.1']
    #allocation5 [shape = 'u8[4096]{0}', space=vmem, size = 0x1000, scoped, tag = 'input window, operand 4, single buffered']
    #allocation6 [shape = 's32[1]{0}', space=sflag, size = 0x4, scoped, tag = 'scoped memory for tpu_custom_call.1']
    #allocation7 [shape = 'u8[98304]{0}', space=vmem, size = 0x18000, scoped, tag = 'input window, operand 5, single buffered']
    #allocation8 [shape = 'u8[65536]{0}', space=vmem, size = 0x10000, scoped, tag = 'input window, operand 7, single buffered']
    #allocation9 [shape = 's32[1]{0}', space=sflag, size = 0x4, scoped, tag = 'scoped memory for tpu_custom_call.1']
    #allocation10 [shape = 'u8[98304]{0}', space=vmem, size = 0x18000, scoped, tag = 'input window, operand 11, single buffered']
    #allocation11 [shape = 'u8[512]{0}', space=smem, size = 0x200, scoped, tag = 'output window, operand 0, single buffered']
    %19 = vsyncpa [#allocation3], 0
    %20 = vsyncpa [#allocation6], 0
    %21 = vsyncpa [#allocation9], 0
    %22 = vsyncpa [#allocation4], 0
    // Predicated region
    $region2: #{tpu_custom_call.1} parent=1 // pred_check
      _
    $region3: #{tpu_custom_call.1} parent=1 // pred_check_branch
      %24 = sbr.rel (0) target = $region5
    $region4: #{tpu_custom_call.1} parent=1 // pred_region
      _
    $region5: #{tpu_custom_call.1} parent=1 // pred_fallthru
      _
    // Predicated region
    $region6: #{tpu_custom_call.1} parent=1 // pred_check
      _
    $region7: #{tpu_custom_call.1} parent=1 // pred_check_branch
      %26 = sbr.rel (0) target = $region9
    $region8: #{tpu_custom_call.1} parent=1 // pred_region
      %s28 = ssub.s32 128, 128
      %29 = vsyncadd [#allocation3], %s28
      %s30 = sshll.u32 [#allocation2], 4
      %s31 = int_to_ptr.vmem [resolvable:$true] %s30
      %36 = dma.hbm_to_vmem [thread:$0]  %s1, 128, %s31, [#allocation3], 64, 64, 4
    $region9: #{tpu_custom_call.1} parent=1 // pred_fallthru
      _
    // Predicated region
    $region10: #{tpu_custom_call.1} parent=1 // pred_check
      _
    $region11: #{tpu_custom_call.1} parent=1 // pred_check_branch
      %38 = sbr.rel (0) target = $region13
    $region12: #{tpu_custom_call.1} parent=1 // pred_region
      _
    $region13: #{tpu_custom_call.1} parent=1 // pred_fallthru
      _
    // Predicated region
    $region14: #{tpu_custom_call.1} parent=1 // pred_check
      _
    $region15: #{tpu_custom_call.1} parent=1 // pred_check_branch
      %40 = sbr.rel (0) target = $region17
    $region16: #{tpu_custom_call.1} parent=1 // pred_region
      _
    $region17: #{tpu_custom_call.1} parent=1 // pred_fallthru
      _
    // Predicated region
    $region18: #{tpu_custom_call.1} parent=1 // pred_check
      _
    $region19: #{tpu_custom_call.1} parent=1 // pred_check_branch
      %42 = sbr.rel (0) target = $region21
    $region20: #{tpu_custom_call.1} parent=1 // pred_region
      %s44 = ssub.s32 128, 128
      %45 = vsyncadd [#allocation6], %s44
      %s46 = sshll.u32 [#allocation5], 4
      %s47 = int_to_ptr.vmem [resolvable:$true] %s46
      %52 = dma.hbm_to_vmem [thread:$0]  %s4, 128, %s47, [#allocation6], 64, 64, 4
    $region21: #{tpu_custom_call.1} parent=1 // pred_fallthru
      _
    // Predicated region
    $region22: #{tpu_custom_call.1} parent=1 // pred_check
      _
    $region23: #{tpu_custom_call.1} parent=1 // pred_check_branch
      %54 = sbr.rel (0) target = $region25
    $region24: #{tpu_custom_call.1} parent=1 // pred_region
      %s56 = ssub.s32 3072, 3072
      %57 = vsyncadd [#allocation6], %s56
      %s58 = sshll.u32 [#allocation7], 4
      %s59 = int_to_ptr.vmem [resolvable:$true] %s58
      %64 = dma.hbm_to_vmem [thread:$0]  %s5, 3072, %s59, [#allocation6], 64, 64, 4
    $region25: #{tpu_custom_call.1} parent=1 // pred_fallthru
      _
    // Predicated region
    $region26: #{tpu_custom_call.1} parent=1 // pred_check
      _
    $region27: #{tpu_custom_call.1} parent=1 // pred_check_branch
      %66 = sbr.rel (0) target = $region29
    $region28: #{tpu_custom_call.1} parent=1 // pred_region
      _
    $region29: #{tpu_custom_call.1} parent=1 // pred_fallthru
      _
    // Predicated region
    $region30: #{tpu_custom_call.1} parent=1 // pred_check
      _
    $region31: #{tpu_custom_call.1} parent=1 // pred_check_branch
      %68 = sbr.rel (0) target = $region33
    $region32: #{tpu_custom_call.1} parent=1 // pred_region
      %s70 = ssub.s32 2048, 2048
      %71 = vsyncadd [#allocation9], %s70
      %s72 = sshll.u32 [#allocation8], 4
      %s73 = int_to_ptr.vmem [resolvable:$true] %s72
      %78 = dma.hbm_to_vmem [thread:$0]  %s7, 2048, %s73, [#allocation9], 64, 64, 4
    $region33: #{tpu_custom_call.1} parent=1 // pred_fallthru
      _
    // Predicated region
    $region34: #{tpu_custom_call.1} parent=1 // pred_check
      _
    $region35: #{tpu_custom_call.1} parent=1 // pred_check_branch
      %80 = sbr.rel (0) target = $region37
    $region36: #{tpu_custom_call.1} parent=1 // pred_region
      _
    $region37: #{tpu_custom_call.1} parent=1 // pred_fallthru
      _
    // Predicated region
    $region38: #{tpu_custom_call.1} parent=1 // pred_check
      _
    $region39: #{tpu_custom_call.1} parent=1 // pred_check_branch
      %82 = sbr.rel (0) target = $region41
    $region40: #{tpu_custom_call.1} parent=1 // pred_region
      _
    $region41: #{tpu_custom_call.1} parent=1 // pred_fallthru
      _
    // Predicated region
    $region42: #{tpu_custom_call.1} parent=1 // pred_check
      _
    $region43: #{tpu_custom_call.1} parent=1 // pred_check_branch
      %84 = sbr.rel (0) target = $region45
    $region44: #{tpu_custom_call.1} parent=1 // pred_region
      _
    $region45: #{tpu_custom_call.1} parent=1 // pred_fallthru
      _
    // Predicated region
    $region46: #{tpu_custom_call.1} parent=1 // pred_check
      _
    $region47: #{tpu_custom_call.1} parent=1 // pred_check_branch
      %86 = sbr.rel (0) target = $region49
    $region48: #{tpu_custom_call.1} parent=1 // pred_region
      %s88 = ssub.s32 3072, 3072
      %89 = vsyncadd [#allocation9], %s88
      %s90 = sshll.u32 [#allocation10], 4
      %s91 = int_to_ptr.vmem [resolvable:$true] %s90
      %96 = dma.hbm_to_vmem [thread:$0]  %s11, 3072, %s91, [#allocation9], 64, 64, 4
    $region49: #{tpu_custom_call.1} parent=1 // pred_fallthru
      _
    // Predicated region
    $region50: #{tpu_custom_call.1} parent=1 // pred_check
      _
    $region51: #{tpu_custom_call.1} parent=1 // pred_check_branch
      %98 = sbr.rel (0) target = $region53
    $region52: #{tpu_custom_call.1} parent=1 // pred_region
      _
    $region53: #{tpu_custom_call.1} parent=1 // pred_fallthru
      _
    // Predicated region
    $region54: #{tpu_custom_call.1} parent=1 // pred_check
      _
    $region55: #{tpu_custom_call.1} parent=1 // pred_check_branch
      %100 = sbr.rel (0) target = $region57
    $region56: #{tpu_custom_call.1} parent=1 // pred_region
      _
    $region57: #{tpu_custom_call.1} parent=1 // pred_fallthru
      _
    // Predicated region
    $region58: #{tpu_custom_call.1} parent=1 // pred_check
      _
    $region59: #{tpu_custom_call.1} parent=1 // pred_check_branch
      %102 = sbr.rel (0) target = $region61
    $region60: #{tpu_custom_call.1} parent=1 // pred_region
      %103 = dma.done [#allocation3], 128
    $region61: #{tpu_custom_call.1} parent=1 // pred_fallthru
      _
    // Predicated region
    $region62: #{tpu_custom_call.1} parent=1 // pred_check
      _
    $region63: #{tpu_custom_call.1} parent=1 // pred_check_branch
      %105 = sbr.rel (0) target = $region65
    $region64: #{tpu_custom_call.1} parent=1 // pred_region
      %106 = dma.done [#allocation6], 128
    $region65: #{tpu_custom_call.1} parent=1 // pred_fallthru
      _
    // Predicated region
    $region66: #{tpu_custom_call.1} parent=1 // pred_check
      _
    $region67: #{tpu_custom_call.1} parent=1 // pred_check_branch
      %108 = sbr.rel (0) target = $region69
    $region68: #{tpu_custom_call.1} parent=1 // pred_region
      %109 = dma.done [#allocation6], 3072
    $region69: #{tpu_custom_call.1} parent=1 // pred_fallthru
      _
    // Predicated region
    $region70: #{tpu_custom_call.1} parent=1 // pred_check
      _
    $region71: #{tpu_custom_call.1} parent=1 // pred_check_branch
      %111 = sbr.rel (0) target = $region73
    $region72: #{tpu_custom_call.1} parent=1 // pred_region
      %112 = dma.done [#allocation9], 2048
    $region73: #{tpu_custom_call.1} parent=1 // pred_fallthru
      _
    // Predicated region
    $region74: #{tpu_custom_call.1} parent=1 // pred_check
      _
    $region75: #{tpu_custom_call.1} parent=1 // pred_check_branch
      %114 = sbr.rel (0) target = $region77
    $region76: #{tpu_custom_call.1} parent=1 // pred_region
      %115 = dma.done [#allocation9], 3072
    $region77: #{tpu_custom_call.1} parent=1 // pred_fallthru
      _
    %v117 = vld [vmem:[%s0] sm:$0xf]
    %v118 = vld [vmem:[%s0 + $0x4] sm:$0xf]
    %v119 = vld [vmem:[%s0 + $0x8] sm:$0xf]
    %v120 = vld [vmem:[%s0 + $0xc] sm:$0xf]
    %v121 = vld [vmem:[%s3] sm:$0xf]
    %v122 = vld [vmem:[%s3 + $0x4] sm:$0xf]
    %v123 = vld [vmem:[%s3 + $0x8] sm:$0xf]
    %v124 = vld [vmem:[%s3 + $0xc] sm:$0xf]
    %v129 = vunpack.c.l.b16 %v117
    %v130 = vunpack.c.l.b16 %v118
    %v131 = vunpack.c.l.b16 %v119
    %v132 = vunpack.c.l.b16 %v120
    %v133 = vpack.c.b16 %v130, %v129
    %v134 = vpack.c.b16 %v132, %v131
    %v139 = vunpack.c.l.b16 %v121
    %v140 = vunpack.c.l.b16 %v122
    %v141 = vunpack.c.l.b16 %v123
    %v142 = vunpack.c.l.b16 %v124
    %v143 = vpack.c.b16 %v140, %v139
    %v144 = vpack.c.b16 %v142, %v141
    %vm147 = vcmask 261120
    %v149 = vsel %vm147, %v133, 0
    %v152 = vsel %vm147, %v134, 0
    %154 = vmatprep.subr.bf16.mxu0 0
    %155 = vmatpush1.bf16.msra.mxu0 %v143
    %156 = vmatprep.subr.bf16.mxu0 0
    %157 = vmatpush1.bf16.msra.mxu0 %v144
    %158 = vmatprep.subr.bf16.mxu0 0
    %159 = vmatpush1.bf16.msra.mxu0 0
    %160 = vmatprep.subr.bf16.mxu0 0
    %161 = vmatpush1.bf16.msra.mxu0 0
    %162 = vmatprep.subr.bf16.mxu0 0
    %163 = vmatpush1.bf16.msra.mxu0 0
    %164 = vmatprep.subr.bf16.mxu0 0
    %165 = vmatpush1.bf16.msra.mxu0 0
    %166 = vmatprep.subr.bf16.mxu0 0
    %167 = vmatpush1.bf16.msra.mxu0 0
    %168 = vmatprep.subr.bf16.mxu0 0
    %169 = vmatpush1.bf16.msra.mxu0 0
    %170 = vmatprep.subr.bf16.mxu0 0
    %171 = vmatpush1.bf16.msra.mxu0 0
    %172 = vmatprep.subr.bf16.mxu0 0
    %173 = vmatpush1.bf16.msra.mxu0 0
    %174 = vmatprep.subr.bf16.mxu0 0
    %175 = vmatpush1.bf16.msra.mxu0 0
    %176 = vmatprep.subr.bf16.mxu0 0
    %177 = vmatpush1.bf16.msra.mxu0 0
    %178 = vmatprep.subr.bf16.mxu0 0
    %179 = vmatpush1.bf16.msra.mxu0 0
    %180 = vmatprep.subr.bf16.mxu0 0
    %181 = vmatpush1.bf16.msra.mxu0 0
    %182 = vmatprep.subr.bf16.mxu0 0
    %183 = vmatpush1.bf16.msra.mxu0 0
    %184 = vmatprep.subr.bf16.mxu0 0
    %185 = vmatpush1.bf16.msra.mxu0 0
    %186 = vmatprep.mubr.bf16.mxu0 0
    %187 = vmatmul.mubr.bf16.gmra.mrb[0].mxu0 %v149
    %v188 = vpop.f32.mrb[0].mxu0
    %v189 = vadd.f32 0.0, %v188
    %v190 = vpop.f32.mrb[0].mxu0
    %v191 = vpop.f32.mrb[0].mxu0
    %v192 = vadd.f32 0.0, %v191
    %v193 = vpop.f32.mrb[0].mxu0
    %194 = vmatprep.mubr.bf16.mxu0 0
    %195 = vmatmul.mubr.bf16.gmra.mrb[0].mxu0 %v152
    %v196 = vpop.f32.mrb[0].mxu0
    %v197 = vadd.f32 0.0, %v196
    %v198 = vpop.f32.mrb[0].mxu0
    %v199 = vpop.f32.mrb[0].mxu0
    %v200 = vadd.f32 0.0, %v199
    %v201 = vpop.f32.mrb[0].mxu0
    %202 = vdwg.mxu0
    %v203 = vld [vmem:[#allocation2] sm:$0xf]
    %v204 = vld [vmem:[#allocation2 + $0x4] sm:$0xf]
    %v207 = vunpack.c.l.b16 %v203
    %v208 = vunpack.c.l.b16 %v204
    %v209 = vpack.c.b16 %v208, %v207
    %v211 = vsel %vm147, %v209, 0
    %213 = vmatprep.subr.bf16.mxu0 0
    %214 = vmatpush1.bf16.msra.mxu0 %v143
    %215 = vmatprep.subr.bf16.mxu0 0
    %216 = vmatpush1.bf16.msra.mxu0 %v144
    %217 = vmatprep.subr.bf16.mxu0 0
    %218 = vmatpush1.bf16.msra.mxu0 0
    %219 = vmatprep.subr.bf16.mxu0 0
    %220 = vmatpush1.bf16.msra.mxu0 0
    %221 = vmatprep.subr.bf16.mxu0 0
    %222 = vmatpush1.bf16.msra.mxu0 0
    %223 = vmatprep.subr.bf16.mxu0 0
    %224 = vmatpush1.bf16.msra.mxu0 0
    %225 = vmatprep.subr.bf16.mxu0 0
    %226 = vmatpush1.bf16.msra.mxu0 0
    %227 = vmatprep.subr.bf16.mxu0 0
    %228 = vmatpush1.bf16.msra.mxu0 0
    %229 = vmatprep.subr.bf16.mxu0 0
    %230 = vmatpush1.bf16.msra.mxu0 0
    %231 = vmatprep.subr.bf16.mxu0 0
    %232 = vmatpush1.bf16.msra.mxu0 0
    %233 = vmatprep.subr.bf16.mxu0 0
    %234 = vmatpush1.bf16.msra.mxu0 0
    %235 = vmatprep.subr.bf16.mxu0 0
    %236 = vmatpush1.bf16.msra.mxu0 0
    %237 = vmatprep.subr.bf16.mxu0 0
    %238 = vmatpush1.bf16.msra.mxu0 0
    %239 = vmatprep.subr.bf16.mxu0 0
    %240 = vmatpush1.bf16.msra.mxu0 0
    %241 = vmatprep.subr.bf16.mxu0 0
    %242 = vmatpush1.bf16.msra.mxu0 0
    %243 = vmatprep.subr.bf16.mxu0 0
    %244 = vmatpush1.bf16.msra.mxu0 0
    %245 = vmatprep.mubr.bf16.mxu0 0
    %246 = vmatmul.mubr.bf16.gmra.mrb[0].mxu0 %v211
    %v247 = vpop.f32.mrb[0].mxu0
    %v248 = vadd.f32 0.0, %v247
    %v249 = vpop.f32.mrb[0].mxu0
    %v250 = vpop.f32.mrb[0].mxu0
    %v251 = vadd.f32 0.0, %v250
    %v252 = vpop.f32.mrb[0].mxu0
    %253 = vdwg.mxu0
    %v254 = vld [vmem:[%s2] sm:$0xf]
    %v255 = vld [vmem:[%s2 + $0x4] sm:$0xf]
    %v256 = vld [vmem:[%s2 + $0x8] sm:$0xf]
    %v257 = vld [vmem:[%s2 + $0xc] sm:$0xf]
    %v258 = vld [vmem:[#allocation5] sm:$0xf]
    %v259 = vld [vmem:[#allocation5 + $0x4] sm:$0xf]
    %v264 = vunpack.c.l.b16 %v254
    %v265 = vunpack.c.l.b16 %v255
    %v266 = vunpack.c.l.b16 %v256
    %v267 = vunpack.c.l.b16 %v257
    %v268 = vpack.c.b16 %v265, %v264
    %v269 = vpack.c.b16 %v267, %v266
    %v272 = vunpack.c.l.b16 %v258
    %v273 = vunpack.c.l.b16 %v259
    %v274 = vpack.c.b16 %v273, %v272
    %vm276 = vcmask 130048
    %v278 = vsel %vm276, %v268, 0
    %v281 = vsel %vm276, %v269, 0
    %283 = vmatprep.subr.bf16.mxu0 0
    %284 = vmatpush1.bf16.msra.mxu0 %v274
    %285 = vmatprep.subr.bf16.mxu0 0
    %286 = vmatpush1.bf16.msra.mxu0 0
    %287 = vmatprep.subr.bf16.mxu0 0
    %288 = vmatpush1.bf16.msra.mxu0 0
    %289 = vmatprep.subr.bf16.mxu0 0
    %290 = vmatpush1.bf16.msra.mxu0 0
    %291 = vmatprep.subr.bf16.mxu0 0
    %292 = vmatpush1.bf16.msra.mxu0 0
    %293 = vmatprep.subr.bf16.mxu0 0
    %294 = vmatpush1.bf16.msra.mxu0 0
    %295 = vmatprep.subr.bf16.mxu0 0
    %296 = vmatpush1.bf16.msra.mxu0 0
    %297 = vmatprep.subr.bf16.mxu0 0
    %298 = vmatpush1.bf16.msra.mxu0 0
    %299 = vmatprep.subr.bf16.mxu0 0
    %300 = vmatpush1.bf16.msra.mxu0 0
    %301 = vmatprep.subr.bf16.mxu0 0
    %302 = vmatpush1.bf16.msra.mxu0 0
    %303 = vmatprep.subr.bf16.mxu0 0
    %304 = vmatpush1.bf16.msra.mxu0 0
    %305 = vmatprep.subr.bf16.mxu0 0
    %306 = vmatpush1.bf16.msra.mxu0 0
    %307 = vmatprep.subr.bf16.mxu0 0
    %308 = vmatpush1.bf16.msra.mxu0 0
    %309 = vmatprep.subr.bf16.mxu0 0
    %310 = vmatpush1.bf16.msra.mxu0 0
    %311 = vmatprep.subr.bf16.mxu0 0
    %312 = vmatpush1.bf16.msra.mxu0 0
    %313 = vmatprep.subr.bf16.mxu0 0
    %314 = vmatpush1.bf16.msra.mxu0 0
    %315 = vmatprep.mubr.bf16.mxu0 0
    %316 = vmatmul.mubr.bf16.gmra.mrb[0].mxu0 %v278
    %v317 = vpop.f32.mrb[0].mxu0
    %v318 = vadd.f32 0.0, %v317
    %v319 = vpop.f32.mrb[0].mxu0
    %v320 = vpop.f32.mrb[0].mxu0
    %v321 = vadd.f32 0.0, %v320
    %v322 = vpop.f32.mrb[0].mxu0
    %323 = vmatprep.mubr.bf16.mxu0 0
    %324 = vmatmul.mubr.bf16.gmra.mrb[0].mxu0 %v281
    %v325 = vpop.f32.mrb[0].mxu0
    %v326 = vadd.f32 0.0, %v325
    %v327 = vpop.f32.mrb[0].mxu0
    %v328 = vpop.f32.mrb[0].mxu0
    %v329 = vadd.f32 0.0, %v328
    %v330 = vpop.f32.mrb[0].mxu0
    %331 = vdwg.mxu0
    %v332 = vunpack.c.l.bf16 %v121
    %v333 = vunpack.c.l.bf16 %v122
    %v334 = vunpack.c.l.bf16 %v123
    %v335 = vunpack.c.l.bf16 %v124
    %v336 = vpack.c.bf16 %v192, %v189
    %v337 = vpack.c.bf16 %v321, %v318
    %v338 = vpack.c.bf16 %v333, %v332
    %v339 = vpack.c.bf16 %v200, %v197
    %v340 = vpack.c.bf16 %v329, %v326
    %v341 = vpack.c.bf16 %v335, %v334
    %v342 = vld [vmem:[#allocation7] sm:$0xf]
    %v343 = vld [vmem:[#allocation7 + $0x4] sm:$0xf]
    %v344 = vld [vmem:[#allocation7 + $0x8] sm:$0xf]
    %v345 = vld [vmem:[#allocation7 + $0xc] sm:$0xf]
    %v346 = vld [vmem:[#allocation7 + $0x10] sm:$0xf]
    %v347 = vld [vmem:[#allocation7 + $0x14] sm:$0xf]
    %v348 = vld [vmem:[#allocation7 + $0x18] sm:$0xf]
    %v349 = vld [vmem:[#allocation7 + $0x1c] sm:$0xf]
    %v350 = vld [vmem:[#allocation7 + $0x20] sm:$0xf]
    %v351 = vld [vmem:[#allocation7 + $0x24] sm:$0xf]
    %v352 = vld [vmem:[#allocation7 + $0x28] sm:$0xf]
    %v353 = vld [vmem:[#allocation7 + $0x2c] sm:$0xf]
    %v354 = vld [vmem:[#allocation7 + $0x30] sm:$0xf]
    %v355 = vld [vmem:[#allocation7 + $0x34] sm:$0xf]
    %v356 = vld [vmem:[#allocation7 + $0x38] sm:$0xf]
    %v357 = vld [vmem:[#allocation7 + $0x3c] sm:$0xf]
    %v358 = vld [vmem:[#allocation7 + $0x40] sm:$0xf]
    %v359 = vld [vmem:[#allocation7 + $0x44] sm:$0xf]
    %v360 = vld [vmem:[#allocation7 + $0x48] sm:$0xf]
    %v361 = vld [vmem:[#allocation7 + $0x4c] sm:$0xf]
    %v362 = vld [vmem:[#allocation7 + $0x50] sm:$0xf]
    %v363 = vld [vmem:[#allocation7 + $0x54] sm:$0xf]
    %v364 = vld [vmem:[#allocation7 + $0x58] sm:$0xf]
    %v365 = vld [vmem:[#allocation7 + $0x5c] sm:$0xf]
    %v366 = vld [vmem:[#allocation7 + $0x60] sm:$0xf]
    %v367 = vld [vmem:[#allocation7 + $0x64] sm:$0xf]
    %v368 = vld [vmem:[#allocation7 + $0x68] sm:$0xf]
    %v369 = vld [vmem:[#allocation7 + $0x6c] sm:$0xf]
    %v370 = vld [vmem:[#allocation7 + $0x70] sm:$0xf]
    %v371 = vld [vmem:[#allocation7 + $0x74] sm:$0xf]
    %v372 = vld [vmem:[#allocation7 + $0x78] sm:$0xf]
    %v373 = vld [vmem:[#allocation7 + $0x7c] sm:$0xf]
    %v374 = vld [vmem:[#allocation7 + $0x80] sm:$0xf]
    %v375 = vld [vmem:[#allocation7 + $0x84] sm:$0xf]
    %v376 = vld [vmem:[#allocation7 + $0x88] sm:$0xf]
    %v377 = vld [vmem:[#allocation7 + $0x8c] sm:$0xf]
    %v378 = vld [vmem:[#allocation7 + $0x90] sm:$0xf]
    %v379 = vld [vmem:[#allocation7 + $0x94] sm:$0xf]
    %v380 = vld [vmem:[#allocation7 + $0x98] sm:$0xf]
    %v381 = vld [vmem:[#allocation7 + $0x9c] sm:$0xf]
    %v382 = vld [vmem:[#allocation7 + $0xa0] sm:$0xf]
    %v383 = vld [vmem:[#allocation7 + $0xa4] sm:$0xf]
    %v384 = vld [vmem:[#allocation7 + $0xa8] sm:$0xf]
    %v385 = vld [vmem:[#allocation7 + $0xac] sm:$0xf]
    %v386 = vld [vmem:[#allocation7 + $0xb0] sm:$0xf]
    %v387 = vld [vmem:[#allocation7 + $0xb4] sm:$0xf]
    %v388 = vld [vmem:[#allocation7 + $0xb8] sm:$0xf]
    %v389 = vld [vmem:[#allocation7 + $0xbc] sm:$0xf]
    %v390 = vld [vmem:[%s6] sm:$0x1]
    %v392 = vlaneseq
    %v393 = vshrl.u32 %v392, 7
    %v394 = vsub.s32 0, %v393
    %v395 = vrot.slane %v390, %v394
    %v445 = vunpack.c.l.b16 %v342
    %v446 = vunpack.c.l.b16 %v343
    %v447 = vunpack.c.l.b16 %v344
    %v448 = vunpack.c.l.b16 %v345
    %v449 = vunpack.c.l.b16 %v346
    %v450 = vunpack.c.l.b16 %v347
    %v451 = vunpack.c.l.b16 %v348
    %v452 = vunpack.c.l.b16 %v349
    %v453 = vunpack.c.l.b16 %v350
    %v454 = vunpack.c.l.b16 %v351
    %v455 = vunpack.c.l.b16 %v352
    %v456 = vunpack.c.l.b16 %v353
    %v457 = vunpack.c.l.b16 %v354
    %v458 = vunpack.c.l.b16 %v355
    %v459 = vunpack.c.l.b16 %v356
    %v460 = vunpack.c.l.b16 %v357
    %v461 = vunpack.c.l.b16 %v358
    %v462 = vunpack.c.l.b16 %v359
    %v463 = vunpack.c.l.b16 %v360
    %v464 = vunpack.c.l.b16 %v361
    %v465 = vunpack.c.l.b16 %v362
    %v466 = vunpack.c.l.b16 %v363
    %v467 = vunpack.c.l.b16 %v364
    %v468 = vunpack.c.l.b16 %v365
    %v469 = vunpack.c.l.b16 %v366
    %v470 = vunpack.c.l.b16 %v367
    %v471 = vunpack.c.l.b16 %v368
    %v472 = vunpack.c.l.b16 %v369
    %v473 = vunpack.c.l.b16 %v370
    %v474 = vunpack.c.l.b16 %v371
    %v475 = vunpack.c.l.b16 %v372
    %v476 = vunpack.c.l.b16 %v373
    %v477 = vunpack.c.l.b16 %v374
    %v478 = vunpack.c.l.b16 %v375
    %v479 = vunpack.c.l.b16 %v376
    %v480 = vunpack.c.l.b16 %v377
    %v481 = vunpack.c.l.b16 %v378
    %v482 = vunpack.c.l.b16 %v379
    %v483 = vunpack.c.l.b16 %v380
    %v484 = vunpack.c.l.b16 %v381
    %v485 = vunpack.c.l.b16 %v382
    %v486 = vunpack.c.l.b16 %v383
    %v487 = vunpack.c.l.b16 %v384
    %v488 = vunpack.c.l.b16 %v385
    %v489 = vunpack.c.l.b16 %v386
    %v490 = vunpack.c.l.b16 %v387
    %v491 = vunpack.c.l.b16 %v388
    %v492 = vunpack.c.l.b16 %v389
    %v493 = vpack.c.b16 %v446, %v445
    %v494 = vpack.c.b16 %v448, %v447
    %v495 = vpack.c.b16 %v450, %v449
    %v496 = vpack.c.b16 %v452, %v451
    %v497 = vpack.c.b16 %v454, %v453
    %v498 = vpack.c.b16 %v456, %v455
    %v499 = vpack.c.b16 %v458, %v457
    %v500 = vpack.c.b16 %v460, %v459
    %v501 = vpack.c.b16 %v462, %v461
    %v502 = vpack.c.b16 %v464, %v463
    %v503 = vpack.c.b16 %v466, %v465
    %v504 = vpack.c.b16 %v468, %v467
    %v505 = vpack.c.b16 %v470, %v469
    %v506 = vpack.c.b16 %v472, %v471
    %v507 = vpack.c.b16 %v474, %v473
    %v508 = vpack.c.b16 %v476, %v475
    %v509 = vpack.c.b16 %v478, %v477
    %v510 = vpack.c.b16 %v480, %v479
    %v511 = vpack.c.b16 %v482, %v481
    %v512 = vpack.c.b16 %v484, %v483
    %v513 = vpack.c.b16 %v486, %v485
    %v514 = vpack.c.b16 %v488, %v487
    %v515 = vpack.c.b16 %v490, %v489
    %v516 = vpack.c.b16 %v492, %v491
    %541 = vmatprep.subr.bf16.mxu0 0
    %542 = vmatpush1.bf16.msra.mxu0 %v493
    %543 = vmatprep.subr.bf16.mxu0 0
    %544 = vmatpush1.bf16.msra.mxu0 %v494
    %545 = vmatprep.subr.bf16.mxu0 0
    %546 = vmatpush1.bf16.msra.mxu0 %v495
    %547 = vmatprep.subr.bf16.mxu0 0
    %548 = vmatpush1.bf16.msra.mxu0 %v496
    %549 = vmatprep.subr.bf16.mxu0 0
    %550 = vmatpush1.bf16.msra.mxu0 %v497
    %551 = vmatprep.subr.bf16.mxu0 0
    %552 = vmatpush1.bf16.msra.mxu0 %v498
    %553 = vmatprep.subr.bf16.mxu0 0
    %554 = vmatpush1.bf16.msra.mxu0 %v499
    %555 = vmatprep.subr.bf16.mxu0 0
    %556 = vmatpush1.bf16.msra.mxu0 %v500
    %557 = vmatprep.subr.bf16.mxu0 0
    %558 = vmatpush1.bf16.msra.mxu0 %v501
    %559 = vmatprep.subr.bf16.mxu0 0
    %560 = vmatpush1.bf16.msra.mxu0 %v502
    %561 = vmatprep.subr.bf16.mxu0 0
    %562 = vmatpush1.bf16.msra.mxu0 %v503
    %563 = vmatprep.subr.bf16.mxu0 0
    %564 = vmatpush1.bf16.msra.mxu0 %v504
    %565 = vmatprep.subr.bf16.mxu0 0
    %566 = vmatpush1.bf16.msra.mxu0 %v505
    %567 = vmatprep.subr.bf16.mxu0 0
    %568 = vmatpush1.bf16.msra.mxu0 %v506
    %569 = vmatprep.subr.bf16.mxu0 0
    %570 = vmatpush1.bf16.msra.mxu0 %v507
    %571 = vmatprep.subr.bf16.mxu0 0
    %572 = vmatpush1.bf16.msra.mxu0 %v508
    %573 = vmatprep.mubr.bf16.mxu0 %v337
    %574 = vmatmul.mubr.bf16.gmra.mrb[0].mxu0 %v336
    %v575 = vpop.f32.mrb[0].mxu0
    %v576 = vadd.f32 %v395, %v575
    %v577 = vpop.f32.mrb[0].mxu0
    %v578 = vpop.f32.mrb[0].mxu0
    %v579 = vadd.f32 %v395, %v578
    %v580 = vpop.f32.mrb[0].mxu0
    %581 = vmatprep.mubr.bf16.mxu0 %v340
    %582 = vmatmul.mubr.bf16.gmra.mrb[0].mxu0 %v339
    %v583 = vpop.f32.mrb[0].mxu0
    %v584 = vadd.f32 %v395, %v583
    %v585 = vpop.f32.mrb[0].mxu0
    %v586 = vpop.f32.mrb[0].mxu0
    %v587 = vadd.f32 %v395, %v586
    %v588 = vpop.f32.mrb[0].mxu0
    %589 = vdwg.mxu0
    %590 = vmatprep.subr.bf16.mxu0 0
    %591 = vmatpush1.bf16.msra.mxu0 %v509
    %592 = vmatprep.subr.bf16.mxu0 0
    %593 = vmatpush1.bf16.msra.mxu0 %v510
    %594 = vmatprep.subr.bf16.mxu0 0
    %595 = vmatpush1.bf16.msra.mxu0 %v511
    %596 = vmatprep.subr.bf16.mxu0 0
    %597 = vmatpush1.bf16.msra.mxu0 %v512
    %598 = vmatprep.subr.bf16.mxu0 0
    %599 = vmatpush1.bf16.msra.mxu0 %v513
    %600 = vmatprep.subr.bf16.mxu0 0
    %601 = vmatpush1.bf16.msra.mxu0 %v514
    %602 = vmatprep.subr.bf16.mxu0 0
    %603 = vmatpush1.bf16.msra.mxu0 %v515
    %604 = vmatprep.subr.bf16.mxu0 0
    %605 = vmatpush1.bf16.msra.mxu0 %v516
    %606 = vmatprep.subr.bf16.mxu0 0
    %607 = vmatpush1.bf16.msra.mxu0 0
    %608 = vmatprep.subr.bf16.mxu0 0
    %609 = vmatpush1.bf16.msra.mxu0 0
    %610 = vmatprep.subr.bf16.mxu0 0
    %611 = vmatpush1.bf16.msra.mxu0 0
    %612 = vmatprep.subr.bf16.mxu0 0
    %613 = vmatpush1.bf16.msra.mxu0 0
    %614 = vmatprep.subr.bf16.mxu0 0
    %615 = vmatpush1.bf16.msra.mxu0 0
    %616 = vmatprep.subr.bf16.mxu0 0
    %617 = vmatpush1.bf16.msra.mxu0 0
    %618 = vmatprep.subr.bf16.mxu0 0
    %619 = vmatpush1.bf16.msra.mxu0 0
    %620 = vmatprep.subr.bf16.mxu0 0
    %621 = vmatpush1.bf16.msra.mxu0 0
    %622 = vmatprep.mubr.bf16.mxu0 0
    %623 = vmatmul.mubr.bf16.gmra.mrb[0].mxu0 %v338
    %v624 = vpop.f32.mrb[0].mxu0
    %v625 = vadd.f32 %v576, %v624
    %v626 = vpop.f32.mrb[0].mxu0
    %v627 = vpop.f32.mrb[0].mxu0
    %v628 = vadd.f32 %v579, %v627
    %v629 = vpop.f32.mrb[0].mxu0
    %630 = vmatprep.mubr.bf16.mxu0 0
    %631 = vmatmul.mubr.bf16.gmra.mrb[0].mxu0 %v341
    %v632 = vpop.f32.mrb[0].mxu0
    %v633 = vadd.f32 %v584, %v632
    %v634 = vpop.f32.mrb[0].mxu0
    %v635 = vpop.f32.mrb[0].mxu0
    %v636 = vadd.f32 %v587, %v635
    %v637 = vpop.f32.mrb[0].mxu0
    %638 = vdwg.mxu0
    %v639 = vmax.f32 %v625, 0.0
    %v640 = vmax.f32 %v628, 0.0
    %v641 = vmax.f32 %v633, 0.0
    %v642 = vmax.f32 %v636, 0.0
    %v643 = vunpack.c.l.bf16 %v258
    %v644 = vunpack.c.l.bf16 %v259
    %v645 = vpack.c.bf16 %v251, %v248
    %v646 = vpack.c.bf16 %v644, %v643
    %v647 = vld [vmem:[#allocation8] sm:$0xf]
    %v648 = vld [vmem:[#allocation8 + $0x4] sm:$0xf]
    %v649 = vld [vmem:[#allocation8 + $0x8] sm:$0xf]
    %v650 = vld [vmem:[#allocation8 + $0xc] sm:$0xf]
    %v651 = vld [vmem:[#allocation8 + $0x10] sm:$0xf]
    %v652 = vld [vmem:[#allocation8 + $0x14] sm:$0xf]
    %v653 = vld [vmem:[#allocation8 + $0x18] sm:$0xf]
    %v654 = vld [vmem:[#allocation8 + $0x1c] sm:$0xf]
    %v655 = vld [vmem:[#allocation8 + $0x20] sm:$0xf]
    %v656 = vld [vmem:[#allocation8 + $0x24] sm:$0xf]
    %v657 = vld [vmem:[#allocation8 + $0x28] sm:$0xf]
    %v658 = vld [vmem:[#allocation8 + $0x2c] sm:$0xf]
    %v659 = vld [vmem:[#allocation8 + $0x30] sm:$0xf]
    %v660 = vld [vmem:[#allocation8 + $0x34] sm:$0xf]
    %v661 = vld [vmem:[#allocation8 + $0x38] sm:$0xf]
    %v662 = vld [vmem:[#allocation8 + $0x3c] sm:$0xf]
    %v663 = vld [vmem:[#allocation8 + $0x40] sm:$0xf]
    %v664 = vld [vmem:[#allocation8 + $0x44] sm:$0xf]
    %v665 = vld [vmem:[#allocation8 + $0x48] sm:$0xf]
    %v666 = vld [vmem:[#allocation8 + $0x4c] sm:$0xf]
    %v667 = vld [vmem:[#allocation8 + $0x50] sm:$0xf]
    %v668 = vld [vmem:[#allocation8 + $0x54] sm:$0xf]
    %v669 = vld [vmem:[#allocation8 + $0x58] sm:$0xf]
    %v670 = vld [vmem:[#allocation8 + $0x5c] sm:$0xf]
    %v671 = vld [vmem:[#allocation8 + $0x60] sm:$0xf]
    %v672 = vld [vmem:[#allocation8 + $0x64] sm:$0xf]
    %v673 = vld [vmem:[#allocation8 + $0x68] sm:$0xf]
    %v674 = vld [vmem:[#allocation8 + $0x6c] sm:$0xf]
    %v675 = vld [vmem:[#allocation8 + $0x70] sm:$0xf]
    %v676 = vld [vmem:[#allocation8 + $0x74] sm:$0xf]
    %v677 = vld [vmem:[#allocation8 + $0x78] sm:$0xf]
    %v678 = vld [vmem:[#allocation8 + $0x7c] sm:$0xf]
    %v679 = vld [vmem:[%s8] sm:$0x1]
    %v681 = vlaneseq
    %v682 = vshrl.u32 %v681, 7
    %v683 = vsub.s32 0, %v682
    %v684 = vrot.slane %v679, %v683
    %v718 = vunpack.c.l.b16 %v647
    %v719 = vunpack.c.l.b16 %v648
    %v720 = vunpack.c.l.b16 %v649
    %v721 = vunpack.c.l.b16 %v650
    %v722 = vunpack.c.l.b16 %v651
    %v723 = vunpack.c.l.b16 %v652
    %v724 = vunpack.c.l.b16 %v653
    %v725 = vunpack.c.l.b16 %v654
    %v726 = vunpack.c.l.b16 %v655
    %v727 = vunpack.c.l.b16 %v656
    %v728 = vunpack.c.l.b16 %v657
    %v729 = vunpack.c.l.b16 %v658
    %v730 = vunpack.c.l.b16 %v659
    %v731 = vunpack.c.l.b16 %v660
    %v732 = vunpack.c.l.b16 %v661
    %v733 = vunpack.c.l.b16 %v662
    %v734 = vunpack.c.l.b16 %v663
    %v735 = vunpack.c.l.b16 %v664
    %v736 = vunpack.c.l.b16 %v665
    %v737 = vunpack.c.l.b16 %v666
    %v738 = vunpack.c.l.b16 %v667
    %v739 = vunpack.c.l.b16 %v668
    %v740 = vunpack.c.l.b16 %v669
    %v741 = vunpack.c.l.b16 %v670
    %v742 = vunpack.c.l.b16 %v671
    %v743 = vunpack.c.l.b16 %v672
    %v744 = vunpack.c.l.b16 %v673
    %v745 = vunpack.c.l.b16 %v674
    %v746 = vunpack.c.l.b16 %v675
    %v747 = vunpack.c.l.b16 %v676
    %v748 = vunpack.c.l.b16 %v677
    %v749 = vunpack.c.l.b16 %v678
    %v750 = vpack.c.b16 %v719, %v718
    %v751 = vpack.c.b16 %v721, %v720
    %v752 = vpack.c.b16 %v723, %v722
    %v753 = vpack.c.b16 %v725, %v724
    %v754 = vpack.c.b16 %v727, %v726
    %v755 = vpack.c.b16 %v729, %v728
    %v756 = vpack.c.b16 %v731, %v730
    %v757 = vpack.c.b16 %v733, %v732
    %v758 = vpack.c.b16 %v735, %v734
    %v759 = vpack.c.b16 %v737, %v736
    %v760 = vpack.c.b16 %v739, %v738
    %v761 = vpack.c.b16 %v741, %v740
    %v762 = vpack.c.b16 %v743, %v742
    %v763 = vpack.c.b16 %v745, %v744
    %v764 = vpack.c.b16 %v747, %v746
    %v765 = vpack.c.b16 %v749, %v748
    %782 = vmatprep.subr.bf16.mxu0 0
    %783 = vmatpush1.bf16.msra.mxu0 %v750
    %784 = vmatprep.subr.bf16.mxu0 0
    %785 = vmatpush1.bf16.msra.mxu0 %v751
    %786 = vmatprep.subr.bf16.mxu0 0
    %787 = vmatpush1.bf16.msra.mxu0 %v752
    %788 = vmatprep.subr.bf16.mxu0 0
    %789 = vmatpush1.bf16.msra.mxu0 %v753
    %790 = vmatprep.subr.bf16.mxu0 0
    %791 = vmatpush1.bf16.msra.mxu0 %v754
    %792 = vmatprep.subr.bf16.mxu0 0
    %793 = vmatpush1.bf16.msra.mxu0 %v755
    %794 = vmatprep.subr.bf16.mxu0 0
    %795 = vmatpush1.bf16.msra.mxu0 %v756
    %796 = vmatprep.subr.bf16.mxu0 0
    %797 = vmatpush1.bf16.msra.mxu0 %v757
    %798 = vmatprep.subr.bf16.mxu0 0
    %799 = vmatpush1.bf16.msra.mxu0 %v758
    %800 = vmatprep.subr.bf16.mxu0 0
    %801 = vmatpush1.bf16.msra.mxu0 %v759
    %802 = vmatprep.subr.bf16.mxu0 0
    %803 = vmatpush1.bf16.msra.mxu0 %v760
    %804 = vmatprep.subr.bf16.mxu0 0
    %805 = vmatpush1.bf16.msra.mxu0 %v761
    %806 = vmatprep.subr.bf16.mxu0 0
    %807 = vmatpush1.bf16.msra.mxu0 %v762
    %808 = vmatprep.subr.bf16.mxu0 0
    %809 = vmatpush1.bf16.msra.mxu0 %v763
    %810 = vmatprep.subr.bf16.mxu0 0
    %811 = vmatpush1.bf16.msra.mxu0 %v764
    %812 = vmatprep.subr.bf16.mxu0 0
    %813 = vmatpush1.bf16.msra.mxu0 %v765
    %814 = vmatprep.mubr.bf16.mxu0 %v646
    %815 = vmatmul.mubr.bf16.gmra.mrb[0].mxu0 %v645
    %v816 = vpop.f32.mrb[0].mxu0
    %v817 = vadd.f32 %v684, %v816
    %v818 = vpop.f32.mrb[0].mxu0
    %v819 = vpop.f32.mrb[0].mxu0
    %v820 = vadd.f32 %v684, %v819
    %v821 = vpop.f32.mrb[0].mxu0
    %822 = vdwg.mxu0
    %v823 = vmax.f32 %v817, 0.0
    %v824 = vmax.f32 %v820, 0.0
    %v825 = vld [vmem:[%s9] sm:$0xf]
    %v826 = vpack.c.bf16 %v640, %v639
    %v827 = vpack.c.bf16 %v642, %v641
    %v829 = vsel %vm147, %v825, 0
    %831 = vmatprep.subr.bf16.mxu0 0
    %832 = vmatpush1.bf16.msra.mxu0 %v826
    %833 = vmatprep.subr.bf16.mxu0 0
    %834 = vmatpush1.bf16.msra.mxu0 %v827
    %835 = vmatprep.subr.bf16.mxu0 0
    %836 = vmatpush1.bf16.msra.mxu0 0
    %837 = vmatprep.subr.bf16.mxu0 0
    %838 = vmatpush1.bf16.msra.mxu0 0
    %839 = vmatprep.subr.bf16.mxu0 0
    %840 = vmatpush1.bf16.msra.mxu0 0
    %841 = vmatprep.subr.bf16.mxu0 0
    %842 = vmatpush1.bf16.msra.mxu0 0
    %843 = vmatprep.subr.bf16.mxu0 0
    %844 = vmatpush1.bf16.msra.mxu0 0
    %845 = vmatprep.subr.bf16.mxu0 0
    %846 = vmatpush1.bf16.msra.mxu0 0
    %847 = vmatprep.subr.bf16.mxu0 0
    %848 = vmatpush1.bf16.msra.mxu0 0
    %849 = vmatprep.subr.bf16.mxu0 0
    %850 = vmatpush1.bf16.msra.mxu0 0
    %851 = vmatprep.subr.bf16.mxu0 0
    %852 = vmatpush1.bf16.msra.mxu0 0
    %853 = vmatprep.subr.bf16.mxu0 0
    %854 = vmatpush1.bf16.msra.mxu0 0
    %855 = vmatprep.subr.bf16.mxu0 0
    %856 = vmatpush1.bf16.msra.mxu0 0
    %857 = vmatprep.subr.bf16.mxu0 0
    %858 = vmatpush1.bf16.msra.mxu0 0
    %859 = vmatprep.subr.bf16.mxu0 0
    %860 = vmatpush1.bf16.msra.mxu0 0
    %861 = vmatprep.subr.bf16.mxu0 0
    %862 = vmatpush1.bf16.msra.mxu0 0
    %863 = vmatprep.mubr.bf16.mxu0 0
    %864 = vmatmul.mubr.bf16.gmra.mrb[0].mxu0 %v829
    %v865 = vpop.f32.mrb[0].mxu0
    %v866 = vadd.f32 0.0, %v865
    %v867 = vpop.f32.mrb[0].mxu0
    %v868 = vpop.f32.mrb[0].mxu0
    %v869 = vpop.f32.mrb[0].mxu0
    %870 = vdwg.mxu0
    %v871 = vld [vmem:[%s10] sm:$0xf]
    %v872 = vpack.c.bf16 %v824, %v823
    %v874 = vsel %vm276, %v871, 0
    %876 = vmatprep.subr.bf16.mxu0 0
    %877 = vmatpush1.bf16.msra.mxu0 %v872
    %878 = vmatprep.subr.bf16.mxu0 0
    %879 = vmatpush1.bf16.msra.mxu0 0
    %880 = vmatprep.subr.bf16.mxu0 0
    %881 = vmatpush1.bf16.msra.mxu0 0
    %882 = vmatprep.subr.bf16.mxu0 0
    %883 = vmatpush1.bf16.msra.mxu0 0
    %884 = vmatprep.subr.bf16.mxu0 0
    %885 = vmatpush1.bf16.msra.mxu0 0
    %886 = vmatprep.subr.bf16.mxu0 0
    %887 = vmatpush1.bf16.msra.mxu0 0
    %888 = vmatprep.subr.bf16.mxu0 0
    %889 = vmatpush1.bf16.msra.mxu0 0
    %890 = vmatprep.subr.bf16.mxu0 0
    %891 = vmatpush1.bf16.msra.mxu0 0
    %892 = vmatprep.subr.bf16.mxu0 0
    %893 = vmatpush1.bf16.msra.mxu0 0
    %894 = vmatprep.subr.bf16.mxu0 0
    %895 = vmatpush1.bf16.msra.mxu0 0
    %896 = vmatprep.subr.bf16.mxu0 0
    %897 = vmatpush1.bf16.msra.mxu0 0
    %898 = vmatprep.subr.bf16.mxu0 0
    %899 = vmatpush1.bf16.msra.mxu0 0
    %900 = vmatprep.subr.bf16.mxu0 0
    %901 = vmatpush1.bf16.msra.mxu0 0
    %902 = vmatprep.subr.bf16.mxu0 0
    %903 = vmatpush1.bf16.msra.mxu0 0
    %904 = vmatprep.subr.bf16.mxu0 0
    %905 = vmatpush1.bf16.msra.mxu0 0
    %906 = vmatprep.subr.bf16.mxu0 0
    %907 = vmatpush1.bf16.msra.mxu0 0
    %908 = vmatprep.mubr.bf16.mxu0 0
    %909 = vmatmul.mubr.bf16.gmra.mrb[0].mxu0 %v874
    %v910 = vpop.f32.mrb[0].mxu0
    %v911 = vadd.f32 0.0, %v910
    %v912 = vpop.f32.mrb[0].mxu0
    %v913 = vpop.f32.mrb[0].mxu0
    %v914 = vpop.f32.mrb[0].mxu0
    %915 = vdwg.mxu0
    %v916 = vpack.c.bf16 %v866, %v866
    %v917 = vpack.c.bf16 %v911, %v911
    %v918 = vpack.c.bf16 %v639, %v639
    %v919 = vld [vmem:[#allocation10] sm:$0xf]
    %v920 = vld [vmem:[#allocation10 + $0x4] sm:$0xf]
    %v921 = vld [vmem:[#allocation10 + $0x8] sm:$0xf]
    %v922 = vld [vmem:[#allocation10 + $0xc] sm:$0xf]
    %v923 = vld [vmem:[#allocation10 + $0x10] sm:$0xf]
    %v924 = vld [vmem:[#allocation10 + $0x14] sm:$0xf]
    %v925 = vld [vmem:[#allocation10 + $0x18] sm:$0xf]
    %v926 = vld [vmem:[#allocation10 + $0x1c] sm:$0xf]
    %v927 = vld [vmem:[#allocation10 + $0x20] sm:$0xf]
    %v928 = vld [vmem:[#allocation10 + $0x24] sm:$0xf]
    %v929 = vld [vmem:[#allocation10 + $0x28] sm:$0xf]
    %v930 = vld [vmem:[#allocation10 + $0x2c] sm:$0xf]
    %v931 = vld [vmem:[#allocation10 + $0x30] sm:$0xf]
    %v932 = vld [vmem:[#allocation10 + $0x34] sm:$0xf]
    %v933 = vld [vmem:[#allocation10 + $0x38] sm:$0xf]
    %v934 = vld [vmem:[#allocation10 + $0x3c] sm:$0xf]
    %v935 = vld [vmem:[#allocation10 + $0x40] sm:$0xf]
    %v936 = vld [vmem:[#allocation10 + $0x44] sm:$0xf]
    %v937 = vld [vmem:[#allocation10 + $0x48] sm:$0xf]
    %v938 = vld [vmem:[#allocation10 + $0x4c] sm:$0xf]
    %v939 = vld [vmem:[#allocation10 + $0x50] sm:$0xf]
    %v940 = vld [vmem:[#allocation10 + $0x54] sm:$0xf]
    %v941 = vld [vmem:[#allocation10 + $0x58] sm:$0xf]
    %v942 = vld [vmem:[#allocation10 + $0x5c] sm:$0xf]
    %v943 = vld [vmem:[#allocation10 + $0x60] sm:$0xf]
    %v944 = vld [vmem:[#allocation10 + $0x64] sm:$0xf]
    %v945 = vld [vmem:[#allocation10 + $0x68] sm:$0xf]
    %v946 = vld [vmem:[#allocation10 + $0x6c] sm:$0xf]
    %v947 = vld [vmem:[#allocation10 + $0x70] sm:$0xf]
    %v948 = vld [vmem:[#allocation10 + $0x74] sm:$0xf]
    %v949 = vld [vmem:[#allocation10 + $0x78] sm:$0xf]
    %v950 = vld [vmem:[#allocation10 + $0x7c] sm:$0xf]
    %v951 = vld [vmem:[#allocation10 + $0x80] sm:$0xf]
    %v952 = vld [vmem:[#allocation10 + $0x84] sm:$0xf]
    %v953 = vld [vmem:[#allocation10 + $0x88] sm:$0xf]
    %v954 = vld [vmem:[#allocation10 + $0x8c] sm:$0xf]
    %v955 = vld [vmem:[#allocation10 + $0x90] sm:$0xf]
    %v956 = vld [vmem:[#allocation10 + $0x94] sm:$0xf]
    %v957 = vld [vmem:[#allocation10 + $0x98] sm:$0xf]
    %v958 = vld [vmem:[#allocation10 + $0x9c] sm:$0xf]
    %v959 = vld [vmem:[#allocation10 + $0xa0] sm:$0xf]
    %v960 = vld [vmem:[#allocation10 + $0xa4] sm:$0xf]
    %v961 = vld [vmem:[#allocation10 + $0xa8] sm:$0xf]
    %v962 = vld [vmem:[#allocation10 + $0xac] sm:$0xf]
    %v963 = vld [vmem:[#allocation10 + $0xb0] sm:$0xf]
    %v964 = vld [vmem:[#allocation10 + $0xb4] sm:$0xf]
    %v965 = vld [vmem:[#allocation10 + $0xb8] sm:$0xf]
    %v966 = vld [vmem:[#allocation10 + $0xbc] sm:$0xf]
    %v967 = vld [vmem:[%s12] sm:$0x1]
    %v969 = vlaneseq
    %v970 = vshrl.u32 %v969, 7
    %v971 = vsub.s32 0, %v970
    %v972 = vrot.slane %v967, %v971
    %v1022 = vunpack.c.l.b16 %v919
    %v1023 = vunpack.c.l.b16 %v920
    %v1024 = vunpack.c.l.b16 %v921
    %v1025 = vunpack.c.l.b16 %v922
    %v1026 = vunpack.c.l.b16 %v923
    %v1027 = vunpack.c.l.b16 %v924
    %v1028 = vunpack.c.l.b16 %v925
    %v1029 = vunpack.c.l.b16 %v926
    %v1030 = vunpack.c.l.b16 %v927
    %v1031 = vunpack.c.l.b16 %v928
    %v1032 = vunpack.c.l.b16 %v929
    %v1033 = vunpack.c.l.b16 %v930
    %v1034 = vunpack.c.l.b16 %v931
    %v1035 = vunpack.c.l.b16 %v932
    %v1036 = vunpack.c.l.b16 %v933
    %v1037 = vunpack.c.l.b16 %v934
    %v1038 = vunpack.c.l.b16 %v935
    %v1039 = vunpack.c.l.b16 %v936
    %v1040 = vunpack.c.l.b16 %v937
    %v1041 = vunpack.c.l.b16 %v938
    %v1042 = vunpack.c.l.b16 %v939
    %v1043 = vunpack.c.l.b16 %v940
    %v1044 = vunpack.c.l.b16 %v941
    %v1045 = vunpack.c.l.b16 %v942
    %v1046 = vunpack.c.l.b16 %v943
    %v1047 = vunpack.c.l.b16 %v944
    %v1048 = vunpack.c.l.b16 %v945
    %v1049 = vunpack.c.l.b16 %v946
    %v1050 = vunpack.c.l.b16 %v947
    %v1051 = vunpack.c.l.b16 %v948
    %v1052 = vunpack.c.l.b16 %v949
    %v1053 = vunpack.c.l.b16 %v950
    %v1054 = vunpack.c.l.b16 %v951
    %v1055 = vunpack.c.l.b16 %v952
    %v1056 = vunpack.c.l.b16 %v953
    %v1057 = vunpack.c.l.b16 %v954
    %v1058 = vunpack.c.l.b16 %v955
    %v1059 = vunpack.c.l.b16 %v956
    %v1060 = vunpack.c.l.b16 %v957
    %v1061 = vunpack.c.l.b16 %v958
    %v1062 = vunpack.c.l.b16 %v959
    %v1063 = vunpack.c.l.b16 %v960
    %v1064 = vunpack.c.l.b16 %v961
    %v1065 = vunpack.c.l.b16 %v962
    %v1066 = vunpack.c.l.b16 %v963
    %v1067 = vunpack.c.l.b16 %v964
    %v1068 = vunpack.c.l.b16 %v965
    %v1069 = vunpack.c.l.b16 %v966
    %v1070 = vpack.c.b16 %v1023, %v1022
    %v1071 = vpack.c.b16 %v1025, %v1024
    %v1072 = vpack.c.b16 %v1027, %v1026
    %v1073 = vpack.c.b16 %v1029, %v1028
    %v1074 = vpack.c.b16 %v1031, %v1030
    %v1075 = vpack.c.b16 %v1033, %v1032
    %v1076 = vpack.c.b16 %v1035, %v1034
    %v1077 = vpack.c.b16 %v1037, %v1036
    %v1078 = vpack.c.b16 %v1039, %v1038
    %v1079 = vpack.c.b16 %v1041, %v1040
    %v1080 = vpack.c.b16 %v1043, %v1042
    %v1081 = vpack.c.b16 %v1045, %v1044
    %v1082 = vpack.c.b16 %v1047, %v1046
    %v1083 = vpack.c.b16 %v1049, %v1048
    %v1084 = vpack.c.b16 %v1051, %v1050
    %v1085 = vpack.c.b16 %v1053, %v1052
    %v1086 = vpack.c.b16 %v1055, %v1054
    %v1087 = vpack.c.b16 %v1057, %v1056
    %v1088 = vpack.c.b16 %v1059, %v1058
    %v1089 = vpack.c.b16 %v1061, %v1060
    %v1090 = vpack.c.b16 %v1063, %v1062
    %v1091 = vpack.c.b16 %v1065, %v1064
    %v1092 = vpack.c.b16 %v1067, %v1066
    %v1093 = vpack.c.b16 %v1069, %v1068
    %1118 = vmatprep.subr.bf16.mxu0 0
    %1119 = vmatpush1.bf16.msra.mxu0 %v1070
    %1120 = vmatprep.subr.bf16.mxu0 0
    %1121 = vmatpush1.bf16.msra.mxu0 %v1071
    %1122 = vmatprep.subr.bf16.mxu0 0
    %1123 = vmatpush1.bf16.msra.mxu0 %v1072
    %1124 = vmatprep.subr.bf16.mxu0 0
    %1125 = vmatpush1.bf16.msra.mxu0 %v1073
    %1126 = vmatprep.subr.bf16.mxu0 0
    %1127 = vmatpush1.bf16.msra.mxu0 %v1074
    %1128 = vmatprep.subr.bf16.mxu0 0
    %1129 = vmatpush1.bf16.msra.mxu0 %v1075
    %1130 = vmatprep.subr.bf16.mxu0 0
    %1131 = vmatpush1.bf16.msra.mxu0 %v1076
    %1132 = vmatprep.subr.bf16.mxu0 0
    %1133 = vmatpush1.bf16.msra.mxu0 %v1077
    %1134 = vmatprep.subr.bf16.mxu0 0
    %1135 = vmatpush1.bf16.msra.mxu0 %v1078
    %1136 = vmatprep.subr.bf16.mxu0 0
    %1137 = vmatpush1.bf16.msra.mxu0 %v1079
    %1138 = vmatprep.subr.bf16.mxu0 0
    %1139 = vmatpush1.bf16.msra.mxu0 %v1080
    %1140 = vmatprep.subr.bf16.mxu0 0
    %1141 = vmatpush1.bf16.msra.mxu0 %v1081
    %1142 = vmatprep.subr.bf16.mxu0 0
    %1143 = vmatpush1.bf16.msra.mxu0 %v1082
    %1144 = vmatprep.subr.bf16.mxu0 0
    %1145 = vmatpush1.bf16.msra.mxu0 %v1083
    %1146 = vmatprep.subr.bf16.mxu0 0
    %1147 = vmatpush1.bf16.msra.mxu0 %v1084
    %1148 = vmatprep.subr.bf16.mxu0 0
    %1149 = vmatpush1.bf16.msra.mxu0 %v1085
    %1150 = vmatprep.mubr.bf16.mxu0 %v917
    %1151 = vmatmul.mubr.bf16.gmra.mrb[0].mxu0 %v916
    %v1152 = vpop.f32.mrb[0].mxu0
    %v1153 = vadd.f32 %v972, %v1152
    %v1154 = vpop.f32.mrb[0].mxu0
    %v1155 = vpop.f32.mrb[0].mxu0
    %v1156 = vpop.f32.mrb[0].mxu0
    %1157 = vdwg.mxu0
    %1158 = vmatprep.subr.bf16.mxu0 0
    %1159 = vmatpush1.bf16.msra.mxu0 %v1086
    %1160 = vmatprep.subr.bf16.mxu0 0
    %1161 = vmatpush1.bf16.msra.mxu0 %v1087
    %1162 = vmatprep.subr.bf16.mxu0 0
    %1163 = vmatpush1.bf16.msra.mxu0 %v1088
    %1164 = vmatprep.subr.bf16.mxu0 0
    %1165 = vmatpush1.bf16.msra.mxu0 %v1089
    %1166 = vmatprep.subr.bf16.mxu0 0
    %1167 = vmatpush1.bf16.msra.mxu0 %v1090
    %1168 = vmatprep.subr.bf16.mxu0 0
    %1169 = vmatpush1.bf16.msra.mxu0 %v1091
    %1170 = vmatprep.subr.bf16.mxu0 0
    %1171 = vmatpush1.bf16.msra.mxu0 %v1092
    %1172 = vmatprep.subr.bf16.mxu0 0
    %1173 = vmatpush1.bf16.msra.mxu0 %v1093
    %1174 = vmatprep.subr.bf16.mxu0 0
    %1175 = vmatpush1.bf16.msra.mxu0 0
    %1176 = vmatprep.subr.bf16.mxu0 0
    %1177 = vmatpush1.bf16.msra.mxu0 0
    %1178 = vmatprep.subr.bf16.mxu0 0
    %1179 = vmatpush1.bf16.msra.mxu0 0
    %1180 = vmatprep.subr.bf16.mxu0 0
    %1181 = vmatpush1.bf16.msra.mxu0 0
    %1182 = vmatprep.subr.bf16.mxu0 0
    %1183 = vmatpush1.bf16.msra.mxu0 0
    %1184 = vmatprep.subr.bf16.mxu0 0
    %1185 = vmatpush1.bf16.msra.mxu0 0
    %1186 = vmatprep.subr.bf16.mxu0 0
    %1187 = vmatpush1.bf16.msra.mxu0 0
    %1188 = vmatprep.subr.bf16.mxu0 0
    %1189 = vmatpush1.bf16.msra.mxu0 0
    %1190 = vmatprep.mubr.bf16.mxu0 0
    %1191 = vmatmul.mubr.bf16.gmra.mrb[0].mxu0 %v918
    %v1192 = vpop.f32.mrb[0].mxu0
    %v1193 = vadd.f32 %v1153, %v1192
    %v1194 = vpop.f32.mrb[0].mxu0
    %v1195 = vpop.f32.mrb[0].mxu0
    %v1196 = vpop.f32.mrb[0].mxu0
    %1197 = vdwg.mxu0
    %v1198 = vlaneseq
    %v1199 = vand.u32 %v1198, 127
    %vm1200 = vcmp.lt.s32.totalorder %v1199, 4
    %v1201 = vsel %vm1200, %v1193, -1e+30
    %1202 = vmax.xlane.f32.xlu0 %v1201
    %v1203 = vpop.xlane.xlu0 %1202
    %v1204 = vsub.f32 %v1201, %v1203
    %v1205 = vmul.f32 %v1204, 1.442695
    %v1206 = vpow.pop %v1205
    %v1207 = vsel %vm1200, %v1206, 0.0
    %1208 = vadd.xlane.f32.xlu0 %v1207
    %v1209 = vpop.xlane.xlu0 %1208
    %v1210 = vlog2.pop %v1209
    %v1211 = vmul.f32 %v1210, 0.6931472
    %v1212 = vadd.f32 %v1203, %v1211
    %v1213 = vld [vmem:[%s13] sm:$0xff]
    %vm1214 = vcmp.eq.s32.totalorder %v1199, %v1213
    %v1215 = vsel %vm1214, 1, 0
    %v1216 = vcvt.s32.f32 %v1215
    %v1217 = vmul.f32 %v1216, %v1193
    %1218 = vadd.xlane.f32.xlu0 %v1217
    %v1219 = vpop.xlane.xlu0 %1218
    %v1220 = vlaneseq
    %v1221 = vshrl.u32 %v1220, 7
    %vm1222 = vcmp.lt.s32.totalorder %v1221, 8
    %v1223 = vsel %vm1222, 1, 0
    %v1224 = vcvt.s32.f32 %v1223
    %v1225 = vsub.f32 %v1212, %v1219
    %v1226 = vmul.f32 %v1225, %v1224
    %vm1227 = vcmask 7168
    %v1228 = vsel %vm1227, %v1226, 0.0
    %1229 = vadd.xlane.f32.xlu0 %v1228
    %v1230 = vpop.xlane.xlu0 %1229
    %v1231 = vrot.slane %v1230, 4
    %v1232 = vadd.f32 %v1230, %v1231
    %v1233 = vrot.slane %v1232, 2
    %v1234 = vadd.f32 %v1232, %v1233
    %v1235 = vrot.slane %v1234, 1
    %v1236 = vadd.f32 %v1234, %v1235
    %s1237 = vtos %v1236
    %s1238 = smul.f32 %s1237, 0.125
    %s1239 = scalar_lea.smem [#allocation11], 0
    %1240 = sst [smem:[%s1239]] %s1238
    // Predicated region
    $region78: #{tpu_custom_call.1} parent=1 // pred_check
      _
    $region79: #{tpu_custom_call.1} parent=1 // pred_check_branch
      %1242 = sbr.rel (0) target = $region81
    $region80: #{tpu_custom_call.1} parent=1 // pred_region
      %s1244 = ssub.s32 16, 16
      %1245 = vsyncadd [#allocation4], %s1244
      %1248 = dma.smem_to_hbm [#allocation11], 16, %s14, [#allocation4]
    $region81: #{tpu_custom_call.1} parent=1 // pred_fallthru
      _
    // Predicated region
    $region82: #{tpu_custom_call.1} parent=1 // pred_check
      _
    $region83: #{tpu_custom_call.1} parent=1 // pred_check_branch
      %1250 = sbr.rel (0) target = $region85
    $region84: #{tpu_custom_call.1} parent=1 // pred_region
      %1251 = dma.done [#allocation4], 16
    $region85: #{tpu_custom_call.1} parent=1 // pred_fallthru
      _
    %1252 = sfence
    %1253 = vsyncpa [#allocation3], 1
    %1254 = vsyncpa [#allocation6], 1
    %1255 = vsyncpa [#allocation9], 1
    %1256 = vsyncpa [#allocation4], 1

</llo_original>
